<compile_context>
chip_gen: v7x
topology: tpu7x:2x2x1
jax: 0.10.0
libtpu: 0.0.40
codegen_flags: <defaults>
</compile_context>

<pallas_src>
import math

import jax
import jax.numpy as jnp
from jax import lax
from jax.experimental import pallas as pl
from jax.experimental.pallas import tpu as pltpu

PAD = 128
POS_DIM = 16                 # pos_dim (time-embedding dim)
HALF = POS_DIM // 2
ENC = 16                     # encoder_layers[0]
TENC = 2 * POS_DIM           # 32  (t_enc_dim)
DEC = 128                    # decoder_layers widths
LN_EPS = 1e-5

# bf16 weight-stack indices (each padded to (128, 128))
TW0, TW1, XW0, XW1, NW0, NW1, NW2 = range(7)
N_W = 7
# f32 vector-stack indices (each padded to (1, 128))
FREQ, PHASE, TB0, XB0, CATB, NB0, NB1, NB2 = range(8)
N_V = 8


def _score_kernel(t_ref, x_ref, w_ref, v_ref, o_ref):
    f32 = jnp.float32

    def vec(i):
        return v_ref[i]                                  # (1, PAD) f32

    def mm(h, wi):
        # bf16 operands (MXU fast path on every generation), f32 accumulation.
        return jnp.dot(h.astype(jnp.bfloat16), w_ref[wi],
                       preferred_element_type=f32)

    def silu(h):
        # h * sigmoid(h); exp + approx reciprocal both go to the EUP slot.
        return h * pl.reciprocal(1.0 + jnp.exp(-h), approx=True)

    def layernorm(h, width):
        # gamma/beta are folded into the following Linear at pack time.
        # Columns >= width of h are exactly zero pre-LN (zero-padded weights &
        # biases), so full-lane sums equal masked sums.  Post-LN padded lanes
        # become -mean/std, but the next weight's padded rows are zero, so
        # they never contribute.
        inv_w = 1.0 / width
        mean = jnp.sum(h, axis=-1, keepdims=True) * inv_w
        d = h - mean
        if width == PAD:
            # full-width LN: two-pass variance (no cancellation risk).
            var = jnp.sum(d * d, axis=-1, keepdims=True) * inv_w
        else:
            # padded-lane-safe single-pass variance (h*h keeps pad lanes at 0).
            var = jnp.sum(h * h, axis=-1, keepdims=True) * inv_w - mean * mean
        return d * lax.rsqrt(var + LN_EPS)

    # --- sinusoidal time embedding: one sin, cos folded in via a phase vector.
    t = t_ref[...]                                       # (tm, 1) f32
    emb = jnp.sin(100.0 * t * vec(FREQ) + vec(PHASE))    # (tm, 128); lanes >= 16 are 0

    # --- t encoder: Linear -> SiLU -> LN (affine folded) -> Linear
    h_t = layernorm(silu(mm(emb, TW0) + vec(TB0)), ENC)

    # --- x encoder: Linear -> SiLU -> LN (affine folded) -> Linear
    h_x = layernorm(silu(mm(x_ref[...], XW0) + vec(XB0)), ENC)

    # --- concat([xemb, temb]): XW1 emits into lanes [0,32), TW1 into [32,64),
    #     so the concat is a single add and the decoder entry is one matmul.
    h = mm(h_x, XW1) + mm(h_t, TW1) + vec(CATB)

    # --- decoder: (Linear -> SiLU -> LN)x2 -> Linear
    h = layernorm(silu(mm(h, NW0) + vec(NB0)), DEC)
    h = layernorm(silu(mm(h, NW1) + vec(NB1)), DEC)
    # padded output columns are exactly zero (zero-padded NW2/NB2); wrapper
    # slices [:N, :dim].
    o_ref[...] = mm(h, NW2) + vec(NB2)


# ---------------------------------------------------------------- packing ---
def _pad_mat(w, row_off=0, col_off=0):
    out = jnp.zeros((PAD, PAD), jnp.float32)
    out = out.at[row_off:row_off + w.shape[0], col_off:col_off + w.shape[1]].set(w)
    return out.astype(jnp.bfloat16)


def _pad_vec(v, off=0):
    return jnp.zeros((1, PAD), jnp.float32).at[0, off:off + v.shape[0]].set(v)


def _fold_ln(gamma, beta, W, b):
    # (y*gamma + beta) @ W + b == y @ (gamma[:,None]*W) + (beta @ W + b)
    return gamma[:, None] * W, beta @ W + b


def init_params(key, dim):
    """PyTorch-style Linear init; LayerNorm affine gamma=1, beta=0."""
    ks = jax.random.split(key, 7)

    def lin(k, fan_in, fan_out):
        k1, k2 = jax.random.split(k)
        bound = 1.0 / math.sqrt(fan_in)
        W = jax.random.uniform(k1, (fan_in, fan_out), jnp.float32, -bound, bound)
        b = jax.random.uniform(k2, (fan_out,), jnp.float32, -bound, bound)
        return W, b

    p = {}
    p["tW0"], p["tb0"] = lin(ks[0], POS_DIM, ENC)
    p["tW1"], p["tb1"] = lin(ks[1], ENC, TENC)
    p["xW0"], p["xb0"] = lin(ks[2], dim, ENC)
    p["xW1"], p["xb1"] = lin(ks[3], ENC, TENC)
    p["nW0"], p["nb0"] = lin(ks[4], 2 * TENC, DEC)
    p["nW1"], p["nb1"] = lin(ks[5], DEC, DEC)
    p["nW2"], p["nb2"] = lin(ks[6], DEC, dim)
    p["t_g0"], p["t_be0"] = jnp.ones((ENC,), jnp.float32), jnp.zeros((ENC,), jnp.float32)
    p["x_g0"], p["x_be0"] = jnp.ones((ENC,), jnp.float32), jnp.zeros((ENC,), jnp.float32)
    p["n_g0"], p["n_be0"] = jnp.ones((DEC,), jnp.float32), jnp.zeros((DEC,), jnp.float32)
    p["n_g1"], p["n_be1"] = jnp.ones((DEC,), jnp.float32), jnp.zeros((DEC,), jnp.float32)
    return p


def pack_params(p):
    emb_scale = math.log(10000.0) / (HALF - 1)
    freqs = jnp.exp(jnp.arange(HALF, dtype=jnp.float32) * -emb_scale)
    freq_vec = jnp.concatenate([freqs, freqs])                         # lanes [0,16)
    phase_vec = jnp.concatenate([jnp.zeros((HALF,), jnp.float32),
                                 jnp.full((HALF,), math.pi / 2, jnp.float32)])

    # Fold each LayerNorm affine into the Linear that consumes it.
    tW1, tb1 = _fold_ln(p["t_g0"], p["t_be0"], p["tW1"], p["tb1"])
    xW1, xb1 = _fold_ln(p["x_g0"], p["x_be0"], p["xW1"], p["xb1"])
    nW1, nb1 = _fold_ln(p["n_g0"], p["n_be0"], p["nW1"], p["nb1"])
    nW2, nb2 = _fold_ln(p["n_g1"], p["n_be1"], p["nW2"], p["nb2"])

    W = jnp.stack([
        _pad_mat(p["tW0"]),                  # TW0: rows [0,16) -> cols [0,16)
        _pad_mat(tW1, col_off=TENC),         # TW1: temb emitted into lanes [32,64)
        _pad_mat(p["xW0"]),                  # XW0: rows [0,dim) -> cols [0,16)
        _pad_mat(xW1),                       # XW1: xemb emitted into lanes [0,32)
        _pad_mat(p["nW0"]),                  # NW0: rows [0,64) (packed concat order)
        _pad_mat(nW1),                       # NW1
        _pad_mat(nW2),                       # NW2: cols [0,dim)
    ])                                        # (7, PAD, PAD) bf16

    catb = _pad_vec(xb1) + _pad_vec(tb1, off=TENC)       # [xb1 | tb1 | 0...]
    V = jnp.stack([
        _pad_vec(freq_vec),
        _pad_vec(phase_vec),
        _pad_vec(p["tb0"]),
        _pad_vec(p["xb0"]),
        catb,
        _pad_vec(p["nb0"]),
        _pad_vec(nb1),
        _pad_vec(nb2),
    ])                                        # (8, 1, PAD) f32
    return W, V


# ------------------------------------------------------------------ wrapper -
def score_network(t, x, W, V, dim, tm=1024):
    if x.ndim == 1:
        x = x[None, :]
    N = x.shape[0]
    assert dim <= PAD

    # Row tile: multiple of 8 sublanes; cap at n8//2 so there are >= 2 grid
    # steps whenever there is enough work (keeps both v7x TensorCores busy).
    n8 = ((N + 7) // 8) * 8
    cap = n8 if n8 < 16 else max(8, ((n8 // 2) // 8) * 8)
    tm = max(8, min((tm // 8) * 8, cap))
    n_pad = ((n8 + tm - 1) // tm) * tm
    grid = (n_pad // tm,)

    # t stays narrow (4 B/row); x is zero-padded to 128 lanes in HBM so the
    # first x layer is a plain full-tile MXU matmul (kernel is compute-bound,
    # the extra read is free and avoids unaligned in-register concat paths).
    t_pad = jnp.zeros((n_pad, 1), jnp.float32).at[:N, :].set(
        t.astype(jnp.float32).reshape(N, 1))
    x_pad = jnp.zeros((n_pad, PAD), jnp.float32).at[:N, :dim].set(
        x.astype(jnp.float32))

    out = pl.pallas_call(
        _score_kernel,
        out_shape=jax.ShapeDtypeStruct((n_pad, PAD), jnp.float32),
        grid=grid,
        in_specs=[
            pl.BlockSpec((tm, 1), lambda i: (i, 0)),            # t
            pl.BlockSpec((tm, PAD), lambda i: (i, 0)),          # x (lane-padded)
            pl.BlockSpec((N_W, PAD, PAD), lambda i: (0, 0, 0)),  # bf16 weight stack
            pl.BlockSpec((N_V, 1, PAD), lambda i: (0, 0, 0)),    # f32 bias/vec stack
        ],
        out_specs=pl.BlockSpec((tm, PAD), lambda i: (i, 0)),     # lane-dense output
        compiler_params=pltpu.CompilerParams(
            dimension_semantics=("parallel",),                   # independent row tiles
            vmem_limit_bytes=32 * 1024 * 1024,
        ),
    )(t_pad, x_pad, W, V)
    return out[:N, :dim]


# ---------------------------------------------------- pure-JAX reference ----
def reference(t, x, p, dim):
    silu = lambda h: h * jax.nn.sigmoid(h)

    def ln(h, g, b):
        mean = h.mean(-1, keepdims=True)
        var = ((h - mean) ** 2).mean(-1, keepdims=True)
        return (h - mean) / jnp.sqrt(var + LN_EPS) * g + b

    emb_scale = math.log(10000.0) / (HALF - 1)
    freqs = jnp.exp(jnp.arange(HALF, dtype=jnp.float32) * -emb_scale)
    e = 100.0 * t.astype(jnp.float32) * freqs[None, :]
    emb = jnp.concatenate([jnp.sin(e), jnp.cos(e)], -1)

    h = ln(silu(emb @ p["tW0"] + p["tb0"]), p["t_g0"], p["t_be0"])
    temb = h @ p["tW1"] + p["tb1"]
    h = ln(silu(x @ p["xW0"] + p["xb0"]), p["x_g0"], p["x_be0"])
    xemb = h @ p["xW1"] + p["xb1"]
    hcat = jnp.concatenate([xemb, temb], -1)
    h = ln(silu(hcat @ p["nW0"] + p["nb0"]), p["n_g0"], p["n_be0"])
    h = ln(silu(h @ p["nW1"] + p["nb1"]), p["n_g1"], p["n_be1"])
    return h @ p["nW2"] + p["nb2"]


if __name__ == "__main__":
    key = jax.random.PRNGKey(0)
    k_t, k_x, k_p = jax.random.split(key, 3)

    DIM = 4
    params = init_params(k_p, DIM)
    W, V = pack_params(params)

    # Small case matching the module docstring shapes (N=2, dim=4).
    N = 2
    t = jax.random.uniform(k_t, (N, 1), jnp.float32)
    x = jax.random.normal(k_x, (N, DIM), jnp.float32)
    out = jax.block_until_ready(score_network(t, x, W, V, DIM))
    ref = reference(t, x, params, DIM)
    assert out.shape == (N, DIM)
    # bf16 matmul operands + approx-reciprocal sigmoid -> loosened tolerance.
    assert jnp.allclose(out, ref, atol=5e-2, rtol=5e-2)

    # Multi-tile case: exercises padded batch rows and the >=2-step grid path.
    N2 = 200
    t2 = jax.random.uniform(k_t, (N2, 1), jnp.float32)
    x2 = jax.random.normal(k_x, (N2, DIM), jnp.float32)
    out2 = jax.block_until_ready(score_network(t2, x2, W, V, DIM))
    ref2 = reference(t2, x2, params, DIM)
    assert out2.shape == (N2, DIM)
    assert jnp.allclose(out2, ref2, atol=5e-2, rtol=5e-2)

    print("KERNEL_OK")
</pallas_src>

<mosaic_0001>
module attributes {stable_mosaic.version = 11 : i64} {
  func.func @_score_kernel(%arg0: i32, %arg1: memref<8x1xf32, #tpu.memory_space<vmem>>, %arg2: memref<8x128xf32, #tpu.memory_space<vmem>>, %arg3: memref<7x128x128xbf16, #tpu.memory_space<vmem>>, %arg4: memref<8x1x128xf32, #tpu.memory_space<vmem>>, %arg5: memref<8x128xf32, #tpu.memory_space<vmem>>) attributes {dimension_semantics = [#tpu.dimension_semantics<parallel>], iteration_bounds = array<i64: 1>, scalar_prefetch = 0 : i64, scratch_operands = 0 : i64, tpu.core_type = #tpu.core_type<tc>, window_params = [{transform_indices = @transform_0, window_bounds = array<i64: 8, 1>}, {transform_indices = @transform_1, window_bounds = array<i64: 8, 128>}, {pipeline_mode = #tpu.pipeline_mode<synchronous>, transform_indices = @transform_2, window_bounds = array<i64: 7, 128, 128>}, {pipeline_mode = #tpu.pipeline_mode<synchronous>, transform_indices = @transform_3, window_bounds = array<i64: 8, 1, 128>}, {transform_indices = @transform_4, window_bounds = array<i64: 8, 128>}]} {
    %c0 = arith.constant 0 : index
    %c0_0 = arith.constant 0 : index
    %0 = vector.load %arg1[%c0, %c0_0] : memref<8x1xf32, #tpu.memory_space<vmem>>, vector<8x1xf32>
    %cst = arith.constant 1.000000e+02 : f32
    %1 = vector.broadcast %cst : f32 to vector<8x1xf32>
    %2 = arith.mulf %1, %0 : vector<8x1xf32>
    %c0_1 = arith.constant 0 : index
    %c0_2 = arith.constant 0 : index
    %c0_3 = arith.constant 0 : index
    %3 = vector.load %arg4[%c0_1, %c0_2, %c0_3] : memref<8x1x128xf32, #tpu.memory_space<vmem>>, vector<1x1x128xf32>
    %4 = vector.shape_cast %3 : vector<1x1x128xf32> to vector<1x128xf32>
    %5 = vector.broadcast %2 : vector<8x1xf32> to vector<8x128xf32>
    %6 = vector.broadcast %4 : vector<1x128xf32> to vector<8x128xf32>
    %7 = arith.mulf %5, %6 : vector<8x128xf32>
    %c1 = arith.constant 1 : index
    %c0_4 = arith.constant 0 : index
    %c0_5 = arith.constant 0 : index
    %8 = vector.load %arg4[%c1, %c0_4, %c0_5] : memref<8x1x128xf32, #tpu.memory_space<vmem>>, vector<1x1x128xf32>
    %9 = vector.shape_cast %8 : vector<1x1x128xf32> to vector<1x128xf32>
    %10 = vector.broadcast %9 : vector<1x128xf32> to vector<8x128xf32>
    %11 = arith.addf %7, %10 : vector<8x128xf32>
    %12 = math.sin %11 : vector<8x128xf32>
    %13 = arith.truncf %12 : vector<8x128xf32> to vector<8x128xbf16>
    %c0_6 = arith.constant 0 : index
    %c0_7 = arith.constant 0 : index
    %c0_8 = arith.constant 0 : index
    %14 = vector.load %arg3[%c0_6, %c0_7, %c0_8] : memref<7x128x128xbf16, #tpu.memory_space<vmem>>, vector<1x128x128xbf16>
    %15 = vector.shape_cast %14 : vector<1x128x128xbf16> to vector<128x128xbf16>
    %cst_9 = arith.constant dense<0.000000e+00> : vector<8x128xf32>
    %16 = tpu.matmul %13, %15, %cst_9 {dimension_numbers = #tpu.dot_dimension_numbers<[1], [0], [0], [1], [0, 0, 1, 1], [], []>} : vector<8x128xbf16>, vector<128x128xbf16>, vector<8x128xf32> -> vector<8x128xf32>
    %c2 = arith.constant 2 : index
    %c0_10 = arith.constant 0 : index
    %c0_11 = arith.constant 0 : index
    %17 = vector.load %arg4[%c2, %c0_10, %c0_11] : memref<8x1x128xf32, #tpu.memory_space<vmem>>, vector<1x1x128xf32>
    %18 = vector.shape_cast %17 : vector<1x1x128xf32> to vector<1x128xf32>
    %19 = vector.broadcast %18 : vector<1x128xf32> to vector<8x128xf32>
    %20 = arith.addf %16, %19 : vector<8x128xf32>
    %cst_12 = arith.constant 0.000000e+00 : f32
    %21 = vector.broadcast %cst_12 : f32 to vector<8x128xf32>
    %22 = arith.subf %21, %20 : vector<8x128xf32>
    %23 = math.exp %22 : vector<8x128xf32>
    %cst_13 = arith.constant 1.000000e+00 : f32
    %24 = vector.broadcast %cst_13 : f32 to vector<8x128xf32>
    %25 = arith.addf %24, %23 : vector<8x128xf32>
    %26 = tpu.reciprocal %25 {approx = true} : vector<8x128xf32> -> vector<8x128xf32>
    %27 = arith.mulf %20, %26 : vector<8x128xf32>
    %cst_14 = arith.constant dense<0.000000e+00> : vector<8xf32>
    %28 = vector.multi_reduction <add>, %27, %cst_14 [1] : vector<8x128xf32> to vector<8xf32>
    %29 = vector.shape_cast %28 : vector<8xf32> to vector<8x1xf32>
    %cst_15 = arith.constant 6.250000e-02 : f32
    %30 = vector.broadcast %cst_15 : f32 to vector<8x1xf32>
    %31 = arith.mulf %29, %30 : vector<8x1xf32>
    %32 = vector.broadcast %31 : vector<8x1xf32> to vector<8x128xf32>
    %33 = arith.subf %27, %32 : vector<8x128xf32>
    %34 = arith.mulf %27, %27 : vector<8x128xf32>
    %cst_16 = arith.constant dense<0.000000e+00> : vector<8xf32>
    %35 = vector.multi_reduction <add>, %34, %cst_16 [1] : vector<8x128xf32> to vector<8xf32>
    %36 = vector.shape_cast %35 : vector<8xf32> to vector<8x1xf32>
    %cst_17 = arith.constant 6.250000e-02 : f32
    %37 = vector.broadcast %cst_17 : f32 to vector<8x1xf32>
    %38 = arith.mulf %36, %37 : vector<8x1xf32>
    %39 = arith.mulf %31, %31 : vector<8x1xf32>
    %40 = arith.subf %38, %39 : vector<8x1xf32>
    %cst_18 = arith.constant 9.99999974E-6 : f32
    %41 = vector.broadcast %cst_18 : f32 to vector<8x1xf32>
    %42 = arith.addf %40, %41 : vector<8x1xf32>
    %43 = math.rsqrt %42 : vector<8x1xf32>
    %44 = vector.broadcast %43 : vector<8x1xf32> to vector<8x128xf32>
    %45 = arith.mulf %33, %44 : vector<8x128xf32>
    %c0_19 = arith.constant 0 : index
    %c0_20 = arith.constant 0 : index
    %46 = vector.load %arg2[%c0_19, %c0_20] : memref<8x128xf32, #tpu.memory_space<vmem>>, vector<8x128xf32>
    %47 = arith.truncf %46 : vector<8x128xf32> to vector<8x128xbf16>
    %c2_21 = arith.constant 2 : index
    %c0_22 = arith.constant 0 : index
    %c0_23 = arith.constant 0 : index
    %48 = vector.load %arg3[%c2_21, %c0_22, %c0_23] : memref<7x128x128xbf16, #tpu.memory_space<vmem>>, vector<1x128x128xbf16>
    %49 = vector.shape_cast %48 : vector<1x128x128xbf16> to vector<128x128xbf16>
    %cst_24 = arith.constant dense<0.000000e+00> : vector<8x128xf32>
    %50 = tpu.matmul %47, %49, %cst_24 {dimension_numbers = #tpu.dot_dimension_numbers<[1], [0], [0], [1], [0, 0, 1, 1], [], []>} : vector<8x128xbf16>, vector<128x128xbf16>, vector<8x128xf32> -> vector<8x128xf32>
    %c3 = arith.constant 3 : index
    %c0_25 = arith.constant 0 : index
    %c0_26 = arith.constant 0 : index
    %51 = vector.load %arg4[%c3, %c0_25, %c0_26] : memref<8x1x128xf32, #tpu.memory_space<vmem>>, vector<1x1x128xf32>
    %52 = vector.shape_cast %51 : vector<1x1x128xf32> to vector<1x128xf32>
    %53 = vector.broadcast %52 : vector<1x128xf32> to vector<8x128xf32>
    %54 = arith.addf %50, %53 : vector<8x128xf32>
    %cst_27 = arith.constant 0.000000e+00 : f32
    %55 = vector.broadcast %cst_27 : f32 to vector<8x128xf32>
    %56 = arith.subf %55, %54 : vector<8x128xf32>
    %57 = math.exp %56 : vector<8x128xf32>
    %cst_28 = arith.constant 1.000000e+00 : f32
    %58 = vector.broadcast %cst_28 : f32 to vector<8x128xf32>
    %59 = arith.addf %58, %57 : vector<8x128xf32>
    %60 = tpu.reciprocal %59 {approx = true} : vector<8x128xf32> -> vector<8x128xf32>
    %61 = arith.mulf %54, %60 : vector<8x128xf32>
    %cst_29 = arith.constant dense<0.000000e+00> : vector<8xf32>
    %62 = vector.multi_reduction <add>, %61, %cst_29 [1] : vector<8x128xf32> to vector<8xf32>
    %63 = vector.shape_cast %62 : vector<8xf32> to vector<8x1xf32>
    %cst_30 = arith.constant 6.250000e-02 : f32
    %64 = vector.broadcast %cst_30 : f32 to vector<8x1xf32>
    %65 = arith.mulf %63, %64 : vector<8x1xf32>
    %66 = vector.broadcast %65 : vector<8x1xf32> to vector<8x128xf32>
    %67 = arith.subf %61, %66 : vector<8x128xf32>
    %68 = arith.mulf %61, %61 : vector<8x128xf32>
    %cst_31 = arith.constant dense<0.000000e+00> : vector<8xf32>
    %69 = vector.multi_reduction <add>, %68, %cst_31 [1] : vector<8x128xf32> to vector<8xf32>
    %70 = vector.shape_cast %69 : vector<8xf32> to vector<8x1xf32>
    %cst_32 = arith.constant 6.250000e-02 : f32
    %71 = vector.broadcast %cst_32 : f32 to vector<8x1xf32>
    %72 = arith.mulf %70, %71 : vector<8x1xf32>
    %73 = arith.mulf %65, %65 : vector<8x1xf32>
    %74 = arith.subf %72, %73 : vector<8x1xf32>
    %cst_33 = arith.constant 9.99999974E-6 : f32
    %75 = vector.broadcast %cst_33 : f32 to vector<8x1xf32>
    %76 = arith.addf %74, %75 : vector<8x1xf32>
    %77 = math.rsqrt %76 : vector<8x1xf32>
    %78 = vector.broadcast %77 : vector<8x1xf32> to vector<8x128xf32>
    %79 = arith.mulf %67, %78 : vector<8x128xf32>
    %80 = arith.truncf %79 : vector<8x128xf32> to vector<8x128xbf16>
    %c3_34 = arith.constant 3 : index
    %c0_35 = arith.constant 0 : index
    %c0_36 = arith.constant 0 : index
    %81 = vector.load %arg3[%c3_34, %c0_35, %c0_36] : memref<7x128x128xbf16, #tpu.memory_space<vmem>>, vector<1x128x128xbf16>
    %82 = vector.shape_cast %81 : vector<1x128x128xbf16> to vector<128x128xbf16>
    %cst_37 = arith.constant dense<0.000000e+00> : vector<8x128xf32>
    %83 = tpu.matmul %80, %82, %cst_37 {dimension_numbers = #tpu.dot_dimension_numbers<[1], [0], [0], [1], [0, 0, 1, 1], [], []>} : vector<8x128xbf16>, vector<128x128xbf16>, vector<8x128xf32> -> vector<8x128xf32>
    %84 = arith.truncf %45 : vector<8x128xf32> to vector<8x128xbf16>
    %c1_38 = arith.constant 1 : index
    %c0_39 = arith.constant 0 : index
    %c0_40 = arith.constant 0 : index
    %85 = vector.load %arg3[%c1_38, %c0_39, %c0_40] : memref<7x128x128xbf16, #tpu.memory_space<vmem>>, vector<1x128x128xbf16>
    %86 = vector.shape_cast %85 : vector<1x128x128xbf16> to vector<128x128xbf16>
    %cst_41 = arith.constant dense<0.000000e+00> : vector<8x128xf32>
    %87 = tpu.matmul %84, %86, %cst_41 {dimension_numbers = #tpu.dot_dimension_numbers<[1], [0], [0], [1], [0, 0, 1, 1], [], []>} : vector<8x128xbf16>, vector<128x128xbf16>, vector<8x128xf32> -> vector<8x128xf32>
    %88 = arith.addf %83, %87 : vector<8x128xf32>
    %c4 = arith.constant 4 : index
    %c0_42 = arith.constant 0 : index
    %c0_43 = arith.constant 0 : index
    %89 = vector.load %arg4[%c4, %c0_42, %c0_43] : memref<8x1x128xf32, #tpu.memory_space<vmem>>, vector<1x1x128xf32>
    %90 = vector.shape_cast %89 : vector<1x1x128xf32> to vector<1x128xf32>
    %91 = vector.broadcast %90 : vector<1x128xf32> to vector<8x128xf32>
    %92 = arith.addf %88, %91 : vector<8x128xf32>
    %93 = arith.truncf %92 : vector<8x128xf32> to vector<8x128xbf16>
    %c4_44 = arith.constant 4 : index
    %c0_45 = arith.constant 0 : index
    %c0_46 = arith.constant 0 : index
    %94 = vector.load %arg3[%c4_44, %c0_45, %c0_46] : memref<7x128x128xbf16, #tpu.memory_space<vmem>>, vector<1x128x128xbf16>
    %95 = vector.shape_cast %94 : vector<1x128x128xbf16> to vector<128x128xbf16>
    %cst_47 = arith.constant dense<0.000000e+00> : vector<8x128xf32>
    %96 = tpu.matmul %93, %95, %cst_47 {dimension_numbers = #tpu.dot_dimension_numbers<[1], [0], [0], [1], [0, 0, 1, 1], [], []>} : vector<8x128xbf16>, vector<128x128xbf16>, vector<8x128xf32> -> vector<8x128xf32>
    %c5 = arith.constant 5 : index
    %c0_48 = arith.constant 0 : index
    %c0_49 = arith.constant 0 : index
    %97 = vector.load %arg4[%c5, %c0_48, %c0_49] : memref<8x1x128xf32, #tpu.memory_space<vmem>>, vector<1x1x128xf32>
    %98 = vector.shape_cast %97 : vector<1x1x128xf32> to vector<1x128xf32>
    %99 = vector.broadcast %98 : vector<1x128xf32> to vector<8x128xf32>
    %100 = arith.addf %96, %99 : vector<8x128xf32>
    %cst_50 = arith.constant 0.000000e+00 : f32
    %101 = vector.broadcast %cst_50 : f32 to vector<8x128xf32>
    %102 = arith.subf %101, %100 : vector<8x128xf32>
    %103 = math.exp %102 : vector<8x128xf32>
    %cst_51 = arith.constant 1.000000e+00 : f32
    %104 = vector.broadcast %cst_51 : f32 to vector<8x128xf32>
    %105 = arith.addf %104, %103 : vector<8x128xf32>
    %106 = tpu.reciprocal %105 {approx = true} : vector<8x128xf32> -> vector<8x128xf32>
    %107 = arith.mulf %100, %106 : vector<8x128xf32>
    %cst_52 = arith.constant dense<0.000000e+00> : vector<8xf32>
    %108 = vector.multi_reduction <add>, %107, %cst_52 [1] : vector<8x128xf32> to vector<8xf32>
    %109 = vector.shape_cast %108 : vector<8xf32> to vector<8x1xf32>
    %cst_53 = arith.constant 7.812500e-03 : f32
    %110 = vector.broadcast %cst_53 : f32 to vector<8x1xf32>
    %111 = arith.mulf %109, %110 : vector<8x1xf32>
    %112 = vector.broadcast %111 : vector<8x1xf32> to vector<8x128xf32>
    %113 = arith.subf %107, %112 : vector<8x128xf32>
    %114 = arith.mulf %113, %113 : vector<8x128xf32>
    %cst_54 = arith.constant dense<0.000000e+00> : vector<8xf32>
    %115 = vector.multi_reduction <add>, %114, %cst_54 [1] : vector<8x128xf32> to vector<8xf32>
    %116 = vector.shape_cast %115 : vector<8xf32> to vector<8x1xf32>
    %cst_55 = arith.constant 7.812500e-03 : f32
    %117 = vector.broadcast %cst_55 : f32 to vector<8x1xf32>
    %118 = arith.mulf %116, %117 : vector<8x1xf32>
    %cst_56 = arith.constant 9.99999974E-6 : f32
    %119 = vector.broadcast %cst_56 : f32 to vector<8x1xf32>
    %120 = arith.addf %118, %119 : vector<8x1xf32>
    %121 = math.rsqrt %120 : vector<8x1xf32>
    %122 = vector.broadcast %121 : vector<8x1xf32> to vector<8x128xf32>
    %123 = arith.mulf %113, %122 : vector<8x128xf32>
    %124 = arith.truncf %123 : vector<8x128xf32> to vector<8x128xbf16>
    %c5_57 = arith.constant 5 : index
    %c0_58 = arith.constant 0 : index
    %c0_59 = arith.constant 0 : index
    %125 = vector.load %arg3[%c5_57, %c0_58, %c0_59] : memref<7x128x128xbf16, #tpu.memory_space<vmem>>, vector<1x128x128xbf16>
    %126 = vector.shape_cast %125 : vector<1x128x128xbf16> to vector<128x128xbf16>
    %cst_60 = arith.constant dense<0.000000e+00> : vector<8x128xf32>
    %127 = tpu.matmul %124, %126, %cst_60 {dimension_numbers = #tpu.dot_dimension_numbers<[1], [0], [0], [1], [0, 0, 1, 1], [], []>} : vector<8x128xbf16>, vector<128x128xbf16>, vector<8x128xf32> -> vector<8x128xf32>
    %c6 = arith.constant 6 : index
    %c0_61 = arith.constant 0 : index
    %c0_62 = arith.constant 0 : index
    %128 = vector.load %arg4[%c6, %c0_61, %c0_62] : memref<8x1x128xf32, #tpu.memory_space<vmem>>, vector<1x1x128xf32>
    %129 = vector.shape_cast %128 : vector<1x1x128xf32> to vector<1x128xf32>
    %130 = vector.broadcast %129 : vector<1x128xf32> to vector<8x128xf32>
    %131 = arith.addf %127, %130 : vector<8x128xf32>
    %cst_63 = arith.constant 0.000000e+00 : f32
    %132 = vector.broadcast %cst_63 : f32 to vector<8x128xf32>
    %133 = arith.subf %132, %131 : vector<8x128xf32>
    %134 = math.exp %133 : vector<8x128xf32>
    %cst_64 = arith.constant 1.000000e+00 : f32
    %135 = vector.broadcast %cst_64 : f32 to vector<8x128xf32>
    %136 = arith.addf %135, %134 : vector<8x128xf32>
    %137 = tpu.reciprocal %136 {approx = true} : vector<8x128xf32> -> vector<8x128xf32>
    %138 = arith.mulf %131, %137 : vector<8x128xf32>
    %cst_65 = arith.constant dense<0.000000e+00> : vector<8xf32>
    %139 = vector.multi_reduction <add>, %138, %cst_65 [1] : vector<8x128xf32> to vector<8xf32>
    %140 = vector.shape_cast %139 : vector<8xf32> to vector<8x1xf32>
    %cst_66 = arith.constant 7.812500e-03 : f32
    %141 = vector.broadcast %cst_66 : f32 to vector<8x1xf32>
    %142 = arith.mulf %140, %141 : vector<8x1xf32>
    %143 = vector.broadcast %142 : vector<8x1xf32> to vector<8x128xf32>
    %144 = arith.subf %138, %143 : vector<8x128xf32>
    %145 = arith.mulf %144, %144 : vector<8x128xf32>
    %cst_67 = arith.constant dense<0.000000e+00> : vector<8xf32>
    %146 = vector.multi_reduction <add>, %145, %cst_67 [1] : vector<8x128xf32> to vector<8xf32>
    %147 = vector.shape_cast %146 : vector<8xf32> to vector<8x1xf32>
    %cst_68 = arith.constant 7.812500e-03 : f32
    %148 = vector.broadcast %cst_68 : f32 to vector<8x1xf32>
    %149 = arith.mulf %147, %148 : vector<8x1xf32>
    %cst_69 = arith.constant 9.99999974E-6 : f32
    %150 = vector.broadcast %cst_69 : f32 to vector<8x1xf32>
    %151 = arith.addf %149, %150 : vector<8x1xf32>
    %152 = math.rsqrt %151 : vector<8x1xf32>
    %153 = vector.broadcast %152 : vector<8x1xf32> to vector<8x128xf32>
    %154 = arith.mulf %144, %153 : vector<8x128xf32>
    %155 = arith.truncf %154 : vector<8x128xf32> to vector<8x128xbf16>
    %c6_70 = arith.constant 6 : index
    %c0_71 = arith.constant 0 : index
    %c0_72 = arith.constant 0 : index
    %156 = vector.load %arg3[%c6_70, %c0_71, %c0_72] : memref<7x128x128xbf16, #tpu.memory_space<vmem>>, vector<1x128x128xbf16>
    %157 = vector.shape_cast %156 : vector<1x128x128xbf16> to vector<128x128xbf16>
    %cst_73 = arith.constant dense<0.000000e+00> : vector<8x128xf32>
    %158 = tpu.matmul %155, %157, %cst_73 {dimension_numbers = #tpu.dot_dimension_numbers<[1], [0], [0], [1], [0, 0, 1, 1], [], []>} : vector<8x128xbf16>, vector<128x128xbf16>, vector<8x128xf32> -> vector<8x128xf32>
    %c7 = arith.constant 7 : index
    %c0_74 = arith.constant 0 : index
    %c0_75 = arith.constant 0 : index
    %159 = vector.load %arg4[%c7, %c0_74, %c0_75] : memref<8x1x128xf32, #tpu.memory_space<vmem>>, vector<1x1x128xf32>
    %160 = vector.shape_cast %159 : vector<1x1x128xf32> to vector<1x128xf32>
    %161 = vector.broadcast %160 : vector<1x128xf32> to vector<8x128xf32>
    %162 = arith.addf %158, %161 : vector<8x128xf32>
    %c0_76 = arith.constant 0 : index
    %c0_77 = arith.constant 0 : index
    %163 = vector.load %arg5[%c0_76, %c0_77] : memref<8x128xf32, #tpu.memory_space<vmem>>, vector<8x128xf32>
    tpu.vector_store %arg5[%c0_76, %c0_77], %162 {strides = array<i32>} : memref<8x128xf32, #tpu.memory_space<vmem>>, vector<8x128xf32>,
    return
  }
  func.func @transform_0(%arg0: i32) -> (i32, i32) {
    %c0_i32 = arith.constant 0 : i32
    %c0_i32_0 = arith.constant 0 : i32
    return %arg0, %c0_i32 : i32, i32
  }
  func.func @transform_1(%arg0: i32) -> (i32, i32) {
    %c0_i32 = arith.constant 0 : i32
    %c0_i32_0 = arith.constant 0 : i32
    return %arg0, %c0_i32 : i32, i32
  }
  func.func @transform_2(%arg0: i32) -> (i32, i32, i32) {
    %c0_i32 = arith.constant 0 : i32
    %c0_i32_0 = arith.constant 0 : i32
    %c0_i32_1 = arith.constant 0 : i32
    %c0_i32_2 = arith.constant 0 : i32
    return %c0_i32, %c0_i32_0, %c0_i32_1 : i32, i32, i32
  }
  func.func @transform_3(%arg0: i32) -> (i32, i32, i32) {
    %c0_i32 = arith.constant 0 : i32
    %c0_i32_0 = arith.constant 0 : i32
    %c0_i32_1 = arith.constant 0 : i32
    %c0_i32_2 = arith.constant 0 : i32
    return %c0_i32, %c0_i32_0, %c0_i32_1 : i32, i32, i32
  }
  func.func @transform_4(%arg0: i32) -> (i32, i32) {
    %c0_i32 = arith.constant 0 : i32
    %c0_i32_0 = arith.constant 0 : i32
    return %arg0, %c0_i32 : i32, i32
  }
}

</mosaic_0001>

<llo_original>
// kernel: tpu_custom_call.1
$region0: #{tpu_custom_call.1}
  #allocation0 [shape = 'u32[]', space=smem, size = 0x4, offset = 0x4, fixed_abs, tag = 'smem constant byte address 0x4 - core index']
  #allocation1 [shape = 'u32[144,128]{1,0:T(1,128)}', space=vmem, size = 0x12000, scoped, tag = 'internal scratch']
  %s0 = inlined_call_operand.vmem [shape: f32[8,1], index: 0, kind: input, shape index: {}]
  %s1 = inlined_call_operand.vmem [shape: f32[8,128], index: 1, kind: input, shape index: {}]
  %s2 = inlined_call_operand.hbm [shape: bf16[7,128,128], index: 2, kind: input, shape index: {}]
  %s3 = inlined_call_operand.vmem [shape: f32[8,1,128], index: 3, kind: input, shape index: {}]
  %s4 = inlined_call_operand.hbm [shape: f32[8,128], index: 4, kind: output, shape index: {}]
  %s5 = sld [smem:[#allocation0]]
  $region30: #{tpu_custom_call.1} parent=0
    _
  %s7 = ssub.s32 1, %s5
  %s8 = scalar_select 0, %s7, %s5
  $region1: #{tpu_custom_call.1} parent=0
    #allocation2 [shape = 'u8[229376]{0}', space=vmem, size = 0x38000, scoped, tag = 'input window, operand 2, single buffered']
    #allocation3 [shape = 's32[1]{0}', space=sflag, size = 0x4, scoped, tag = 'scoped memory for tpu_custom_call.1']
    #allocation4 [shape = 's32[1]{0}', space=sflag, size = 0x4, scoped, tag = 'scoped memory for tpu_custom_call.1']
    #allocation5 [shape = 'u8[4096]{0}', space=vmem, size = 0x1000, scoped, tag = 'output window, operand 0, single buffered']
    %9 = vsyncpa [#allocation3], 0
    %10 = vsyncpa [#allocation4], 0
    // Predicated region
    $region2: #{tpu_custom_call.1} parent=1 // pred_check
      _
    $region3: #{tpu_custom_call.1} parent=1 // pred_check_branch
      %12 = sbr.rel (0) target = $region5
    $region4: #{tpu_custom_call.1} parent=1 // pred_region
      _
    $region5: #{tpu_custom_call.1} parent=1 // pred_fallthru
      _
    // Predicated region
    $region6: #{tpu_custom_call.1} parent=1 // pred_check
      _
    $region7: #{tpu_custom_call.1} parent=1 // pred_check_branch
      %14 = sbr.rel (0) target = $region9
    $region8: #{tpu_custom_call.1} parent=1 // pred_region
      _
    $region9: #{tpu_custom_call.1} parent=1 // pred_fallthru
      _
    // Predicated region
    $region10: #{tpu_custom_call.1} parent=1 // pred_check
      _
    $region11: #{tpu_custom_call.1} parent=1 // pred_check_branch
      %16 = sbr.rel (0) target = $region13
    $region12: #{tpu_custom_call.1} parent=1 // pred_region
      %s18 = ssub.s32 7168, 7168
      %19 = vsyncadd [#allocation3], %s18
      %s20 = sshll.u32 [#allocation2], 4
      %s21 = int_to_ptr.vmem [resolvable:$true] %s20
      %26 = dma.hbm_to_vmem [thread:$0]  %s2, 7168, %s21, [#allocation3], 64, 64, 4
    $region13: #{tpu_custom_call.1} parent=1 // pred_fallthru
      _
    // Predicated region
    $region14: #{tpu_custom_call.1} parent=1 // pred_check
      _
    $region15: #{tpu_custom_call.1} parent=1 // pred_check_branch
      %28 = sbr.rel (0) target = $region17
    $region16: #{tpu_custom_call.1} parent=1 // pred_region
      _
    $region17: #{tpu_custom_call.1} parent=1 // pred_fallthru
      _
    // Predicated region
    $region18: #{tpu_custom_call.1} parent=1 // pred_check
      _
    $region19: #{tpu_custom_call.1} parent=1 // pred_check_branch
      %30 = sbr.rel (0) target = $region21
    $region20: #{tpu_custom_call.1} parent=1 // pred_region
      %31 = dma.done [#allocation3], 7168
    $region21: #{tpu_custom_call.1} parent=1 // pred_fallthru
      _
    %v33 = vld [vmem:[%s0] sm:$0xff]
    %v34 = vmul.f32 %v33, 100.0
    %v35 = vld [vmem:[%s3] sm:$0x1]
    %37 = vset.pattern.permute.xlu0 0
    %38 = vperm.xlu0 %37, %v34
    %v39 = vpop.permute.xlu0 %38
    %v42 = vlaneseq
    %v43 = vshrl.u32 %v42, 7
    %v44 = vsub.s32 0, %v43
    %v45 = vrot.slane %v35, %v44
    %v47 = vmul.f32 %v39, %v45
    %s48 = scalar_lea.vmem %s3, 1
    %v49 = vld [vmem:[%s48] sm:$0x1]
    %v51 = vlaneseq
    %v52 = vshrl.u32 %v51, 7
    %v53 = vsub.s32 0, %v52
    %v54 = vrot.slane %v49, %v53
    %v56 = vadd.f32 %v47, %v54
    %v57 = vand.u32 2147483647, %v56
    %vm58 = vcmp.le.f32.partialorder %v57, 0.7853982
    %vm59 = vcmp.lt.s32.totalorder %v56, 0
    %v60 = vand.u32 %v56, 2139095040
    %v61 = vshrl.u32 %v60, 23
    %v62 = vsub.s32 %v61, 127
    %v63 = vand.u32 2147483647, %v56
    %v64 = vand.u32 %v63, 8388607
    %v65 = vor.u32 %v64, 8388608
    %v66 = vsub.s32 0, %v65
    %v67 = vadd.s32 %v62, 1
    %vm68 = vcmp.gt.s32.totalorder %v67, 0
    %v69 = vsel %vm68, %v67, 0
    %v70 = vshrl.u32 %v69, 5
    %v71 = vand.u32 %v69, 31
    %v72 = vsub.s32 32, %v71
    %v73 = vshrl.u32 683565275, %v72
    %v74 = vshll.u32 683565275, %v71
    %v75 = vshrl.u32 2475754826, %v72
    %v76 = vor.u32 %v74, %v75
    %v77 = vshll.u32 2475754826, %v71
    %v78 = vshrl.u32 2131351028, %v72
    %v79 = vor.u32 %v77, %v78
    %v80 = vshll.u32 2131351028, %v71
    %v81 = vshrl.u32 2102212464, %v72
    %v82 = vor.u32 %v80, %v81
    %v83 = vshll.u32 2102212464, %v71
    %v84 = vshrl.u32 920167782, %v72
    %v85 = vor.u32 %v83, %v84
    %v86 = vshll.u32 920167782, %v71
    %v87 = vshrl.u32 1326507024, %v72
    %v88 = vor.u32 %v86, %v87
    %vm89 = vcmp.lt.s32.totalorder %v70, 1
    %vm90 = vcmp.lt.s32.totalorder %v70, 2
    %vm91 = vcmp.lt.s32.totalorder %v70, 3
    %vm92 = vcmp.lt.s32.totalorder %v70, 4
    %v93 = vsel %vm89, %v73, %v76
    %v94 = vsel %vm92, %v82, 2102212464
    %v95 = vsel %vm91, %v79, %v94
    %v96 = vsel %vm90, %v93, %v95
    %v97 = vsel %vm89, %v76, %v79
    %v98 = vsel %vm92, %v85, 920167782
    %v99 = vsel %vm91, %v82, %v98
    %v100 = vsel %vm90, %v97, %v99
    %v101 = vsel %vm89, %v79, %v82
    %v102 = vsel %vm92, %v88, 1326507024
    %v103 = vsel %vm91, %v85, %v102
    %v104 = vsel %vm90, %v101, %v103
    %v105 = vshll.u32 %v65, 8
    %v106 = vmul.u32.u64.compose %v105, %v104
    %v107 = vextract.low.u32 %v106
    %v108 = vextract.high.u32 %v106
    %v109 = vmul.u32.u64.compose %v105, %v100
    %v110 = vextract.low.u32 %v109
    %v111 = vextract.high.u32 %v109
    %v112 = vmul.u32 %v105, %v96
    %v113 = vadd.s32 %v108, %v110
    %vm114 = vc.u32 %v108, %v110
    %v115 = vadd.s32 %v111, 1
    %v116 = vsel %vm114, %v115, %v111
    %v117 = vadd.s32 %v112, %v116
    %v118 = vadd.s32 %v117, 536870912
    %v119 = vshrl.u32 %v118, 30
    %v120 = vshll.u32 %v119, 30
    %v121 = vsub.s32 %v117, %v120
    %vm122 = vcmp.lt.s32.totalorder %v121, 0
    %v123 = vsub.s32 0, %v121
    %v124 = vsel %vm122, %v123, %v121
    %v125 = vclz %v124
    %v126 = vsub.s32 %v125, 2
    %vm127 = vcmp.gt.s32.totalorder 0, %v126
    %v128 = vsel %vm127, 0, %v126
    %v129 = vsub.s32 32, %v128
    %v130 = vshll.u32 %v121, %v128
    %v131 = vshrl.u32 %v113, %v129
    %v132 = vor.u32 %v130, %v131
    %v133 = vsub.s32 4294967266, %v128
    %v134 = vadd.s32 %v133, 127
    %v135 = vshll.u32 %v134, 23
    %v136 = vor.u32 4788187, %v135
    %v137 = vand.u32 2147483647, %v136
    %v139 = vcvt.s32.f32 %v132
    %v140 = vmul.f32 %v139, %v137
    %v141 = vxor.u32 %v140, 2147483648
    %v142 = vsel %vm59, %v141, %v140
    %v143 = vsub.s32 4, %v119
    %v144 = vsel %vm59, %v143, %v119
    %v145 = vsel %vm58, %v56, %v142
    %v146 = vsel %vm58, 0, %v144
    %v147 = vcosq.f32.pop %v145
    %v148 = vsinq.f32.pop %v145
    %vm149 = vweird.f32 %v56
    %v150 = vadd.s32 %v146, 3
    %v151 = vand.u32 %v150, 3
    %vm152 = vcmp.lt.s32.totalorder %v151, 2
    %vm153 = vcmp.eq.s32.totalorder %v151, 0
    %v154 = vxor.u32 %v148, 2147483648
    %v155 = vsel %vm153, %v147, %v154
    %vm156 = vcmp.eq.s32.totalorder %v151, 2
    %v157 = vxor.u32 %v147, 2147483648
    %v158 = vsel %vm156, %v157, %v148
    %v159 = vsel %vm152, %v155, %v158
    %v160 = vsel %vm149, nan, %v159
    %v161 = vpack.c.bf16 %v160, %v160
    %v162 = vld [vmem:[#allocation2] sm:$0xf]
    %v163 = vld [vmem:[#allocation2 + $0x4] sm:$0xf]
    %v164 = vld [vmem:[#allocation2 + $0x8] sm:$0xf]
    %v165 = vld [vmem:[#allocation2 + $0xc] sm:$0xf]
    %v166 = vld [vmem:[#allocation2 + $0x10] sm:$0xf]
    %v167 = vld [vmem:[#allocation2 + $0x14] sm:$0xf]
    %v168 = vld [vmem:[#allocation2 + $0x18] sm:$0xf]
    %v169 = vld [vmem:[#allocation2 + $0x1c] sm:$0xf]
    %v170 = vld [vmem:[#allocation2 + $0x20] sm:$0xf]
    %v171 = vld [vmem:[#allocation2 + $0x24] sm:$0xf]
    %v172 = vld [vmem:[#allocation2 + $0x28] sm:$0xf]
    %v173 = vld [vmem:[#allocation2 + $0x2c] sm:$0xf]
    %v174 = vld [vmem:[#allocation2 + $0x30] sm:$0xf]
    %v175 = vld [vmem:[#allocation2 + $0x34] sm:$0xf]
    %v176 = vld [vmem:[#allocation2 + $0x38] sm:$0xf]
    %v177 = vld [vmem:[#allocation2 + $0x3c] sm:$0xf]
    %s178 = scalar_lea.vmem %s3, 2
    %v179 = vld [vmem:[%s178] sm:$0x1]
    %v181 = vlaneseq
    %v182 = vshrl.u32 %v181, 7
    %v183 = vsub.s32 0, %v182
    %v184 = vrot.slane %v179, %v183
    %v202 = vunpack.c.l.b16 %v162
    %v203 = vunpack.c.l.b16 %v163
    %v204 = vunpack.c.l.b16 %v164
    %v205 = vunpack.c.l.b16 %v165
    %v206 = vunpack.c.l.b16 %v166
    %v207 = vunpack.c.l.b16 %v167
    %v208 = vunpack.c.l.b16 %v168
    %v209 = vunpack.c.l.b16 %v169
    %v210 = vunpack.c.l.b16 %v170
    %v211 = vunpack.c.l.b16 %v171
    %v212 = vunpack.c.l.b16 %v172
    %v213 = vunpack.c.l.b16 %v173
    %v214 = vunpack.c.l.b16 %v174
    %v215 = vunpack.c.l.b16 %v175
    %v216 = vunpack.c.l.b16 %v176
    %v217 = vunpack.c.l.b16 %v177
    %v218 = vpack.c.b16 %v203, %v202
    %v219 = vpack.c.b16 %v205, %v204
    %v220 = vpack.c.b16 %v207, %v206
    %v221 = vpack.c.b16 %v209, %v208
    %v222 = vpack.c.b16 %v211, %v210
    %v223 = vpack.c.b16 %v213, %v212
    %v224 = vpack.c.b16 %v215, %v214
    %v225 = vpack.c.b16 %v217, %v216
    %234 = vmatprep.subr.bf16.mxu0 0
    %235 = vmatpush1.bf16.msra.mxu0 %v218
    %236 = vmatprep.subr.bf16.mxu0 0
    %237 = vmatpush1.bf16.msra.mxu0 %v219
    %238 = vmatprep.subr.bf16.mxu0 0
    %239 = vmatpush1.bf16.msra.mxu0 %v220
    %240 = vmatprep.subr.bf16.mxu0 0
    %241 = vmatpush1.bf16.msra.mxu0 %v221
    %242 = vmatprep.subr.bf16.mxu0 0
    %243 = vmatpush1.bf16.msra.mxu0 %v222
    %244 = vmatprep.subr.bf16.mxu0 0
    %245 = vmatpush1.bf16.msra.mxu0 %v223
    %246 = vmatprep.subr.bf16.mxu0 0
    %247 = vmatpush1.bf16.msra.mxu0 %v224
    %248 = vmatprep.subr.bf16.mxu0 0
    %249 = vmatpush1.bf16.msra.mxu0 %v225
    %250 = vmatprep.subr.bf16.mxu0 0
    %251 = vmatpush1.bf16.msra.mxu0 0
    %252 = vmatprep.subr.bf16.mxu0 0
    %253 = vmatpush1.bf16.msra.mxu0 0
    %254 = vmatprep.subr.bf16.mxu0 0
    %255 = vmatpush1.bf16.msra.mxu0 0
    %256 = vmatprep.subr.bf16.mxu0 0
    %257 = vmatpush1.bf16.msra.mxu0 0
    %258 = vmatprep.subr.bf16.mxu0 0
    %259 = vmatpush1.bf16.msra.mxu0 0
    %260 = vmatprep.subr.bf16.mxu0 0
    %261 = vmatpush1.bf16.msra.mxu0 0
    %262 = vmatprep.subr.bf16.mxu0 0
    %263 = vmatpush1.bf16.msra.mxu0 0
    %264 = vmatprep.subr.bf16.mxu0 0
    %265 = vmatpush1.bf16.msra.mxu0 0
    %266 = vmatprep.mubr.bf16.mxu0 0
    %267 = vmatmul.mubr.bf16.gmra.mrb[0].mxu0 %v161
    %v268 = vpop.f32.mrb[0].mxu0
    %v269 = vadd.f32 %v184, %v268
    %v270 = vpop.f32.mrb[0].mxu0
    %v271 = vpop.f32.mrb[0].mxu0
    %v272 = vpop.f32.mrb[0].mxu0
    %273 = vdwg.mxu0
    %v274 = vsub.f32 0.0, %v269
    %v275 = vmul.f32 %v274, 1.442695
    %v276 = vpow.pop %v275
    %v277 = vadd.f32 %v276, 1.0
    %v278 = vrcp.pop %v277
    %v279 = vmul.f32 %v269, %v278
    %280 = vadd.xlane.f32.xlu0 %v279
    %v281 = vpop.xlane.xlu0 %280
    %v282 = vmul.f32 %v281, 0.0625
    %v283 = vsub.f32 %v279, %v282
    %v284 = vmul.f32 %v279, %v279
    %285 = vadd.xlane.f32.xlu0 %v284
    %v286 = vpop.xlane.xlu0 %285
    %v287 = vmul.f32 %v286, 0.0625
    %v288 = vmul.f32 %v282, %v282
    %v289 = vsub.f32 %v287, %v288
    %v290 = vadd.f32 %v289, 1e-05
    %v291 = vrsqrt.pop %v290
    %v292 = vmul.f32 %v283, %v291
    %v293 = vld [vmem:[%s1] sm:$0xff]
    %v294 = vpack.c.bf16 %v293, %v293
    %s295 = scalar_lea.vmem [#allocation2], 128
    %v296 = vld [vmem:[%s295] sm:$0xf]
    %v297 = vld [vmem:[%s295 + $0x4] sm:$0xf]
    %v298 = vld [vmem:[%s295 + $0x8] sm:$0xf]
    %v299 = vld [vmem:[%s295 + $0xc] sm:$0xf]
    %v300 = vld [vmem:[%s295 + $0x10] sm:$0xf]
    %v301 = vld [vmem:[%s295 + $0x14] sm:$0xf]
    %v302 = vld [vmem:[%s295 + $0x18] sm:$0xf]
    %v303 = vld [vmem:[%s295 + $0x1c] sm:$0xf]
    %v304 = vld [vmem:[%s295 + $0x20] sm:$0xf]
    %v305 = vld [vmem:[%s295 + $0x24] sm:$0xf]
    %v306 = vld [vmem:[%s295 + $0x28] sm:$0xf]
    %v307 = vld [vmem:[%s295 + $0x2c] sm:$0xf]
    %v308 = vld [vmem:[%s295 + $0x30] sm:$0xf]
    %v309 = vld [vmem:[%s295 + $0x34] sm:$0xf]
    %v310 = vld [vmem:[%s295 + $0x38] sm:$0xf]
    %v311 = vld [vmem:[%s295 + $0x3c] sm:$0xf]
    %s312 = scalar_lea.vmem %s3, 3
    %v313 = vld [vmem:[%s312] sm:$0x1]
    %v315 = vlaneseq
    %v316 = vshrl.u32 %v315, 7
    %v317 = vsub.s32 0, %v316
    %v318 = vrot.slane %v313, %v317
    %v336 = vunpack.c.l.b16 %v296
    %v337 = vunpack.c.l.b16 %v297
    %v338 = vunpack.c.l.b16 %v298
    %v339 = vunpack.c.l.b16 %v299
    %v340 = vunpack.c.l.b16 %v300
    %v341 = vunpack.c.l.b16 %v301
    %v342 = vunpack.c.l.b16 %v302
    %v343 = vunpack.c.l.b16 %v303
    %v344 = vunpack.c.l.b16 %v304
    %v345 = vunpack.c.l.b16 %v305
    %v346 = vunpack.c.l.b16 %v306
    %v347 = vunpack.c.l.b16 %v307
    %v348 = vunpack.c.l.b16 %v308
    %v349 = vunpack.c.l.b16 %v309
    %v350 = vunpack.c.l.b16 %v310
    %v351 = vunpack.c.l.b16 %v311
    %v352 = vpack.c.b16 %v337, %v336
    %v353 = vpack.c.b16 %v339, %v338
    %v354 = vpack.c.b16 %v341, %v340
    %v355 = vpack.c.b16 %v343, %v342
    %v356 = vpack.c.b16 %v345, %v344
    %v357 = vpack.c.b16 %v347, %v346
    %v358 = vpack.c.b16 %v349, %v348
    %v359 = vpack.c.b16 %v351, %v350
    %368 = vmatprep.subr.bf16.mxu0 0
    %369 = vmatpush1.bf16.msra.mxu0 %v352
    %370 = vmatprep.subr.bf16.mxu0 0
    %371 = vmatpush1.bf16.msra.mxu0 %v353
    %372 = vmatprep.subr.bf16.mxu0 0
    %373 = vmatpush1.bf16.msra.mxu0 %v354
    %374 = vmatprep.subr.bf16.mxu0 0
    %375 = vmatpush1.bf16.msra.mxu0 %v355
    %376 = vmatprep.subr.bf16.mxu0 0
    %377 = vmatpush1.bf16.msra.mxu0 %v356
    %378 = vmatprep.subr.bf16.mxu0 0
    %379 = vmatpush1.bf16.msra.mxu0 %v357
    %380 = vmatprep.subr.bf16.mxu0 0
    %381 = vmatpush1.bf16.msra.mxu0 %v358
    %382 = vmatprep.subr.bf16.mxu0 0
    %383 = vmatpush1.bf16.msra.mxu0 %v359
    %384 = vmatprep.subr.bf16.mxu0 0
    %385 = vmatpush1.bf16.msra.mxu0 0
    %386 = vmatprep.subr.bf16.mxu0 0
    %387 = vmatpush1.bf16.msra.mxu0 0
    %388 = vmatprep.subr.bf16.mxu0 0
    %389 = vmatpush1.bf16.msra.mxu0 0
    %390 = vmatprep.subr.bf16.mxu0 0
    %391 = vmatpush1.bf16.msra.mxu0 0
    %392 = vmatprep.subr.bf16.mxu0 0
    %393 = vmatpush1.bf16.msra.mxu0 0
    %394 = vmatprep.subr.bf16.mxu0 0
    %395 = vmatpush1.bf16.msra.mxu0 0
    %396 = vmatprep.subr.bf16.mxu0 0
    %397 = vmatpush1.bf16.msra.mxu0 0
    %398 = vmatprep.subr.bf16.mxu0 0
    %399 = vmatpush1.bf16.msra.mxu0 0
    %400 = vmatprep.mubr.bf16.mxu0 0
    %401 = vmatmul.mubr.bf16.gmra.mrb[0].mxu0 %v294
    %v402 = vpop.f32.mrb[0].mxu0
    %v403 = vadd.f32 %v318, %v402
    %v404 = vpop.f32.mrb[0].mxu0
    %v405 = vpop.f32.mrb[0].mxu0
    %v406 = vpop.f32.mrb[0].mxu0
    %407 = vdwg.mxu0
    %v408 = vsub.f32 0.0, %v403
    %v409 = vmul.f32 %v408, 1.442695
    %v410 = vpow.pop %v409
    %v411 = vadd.f32 %v410, 1.0
    %v412 = vrcp.pop %v411
    %v413 = vmul.f32 %v403, %v412
    %414 = vadd.xlane.f32.xlu0 %v413
    %v415 = vpop.xlane.xlu0 %414
    %v416 = vmul.f32 %v415, 0.0625
    %v417 = vsub.f32 %v413, %v416
    %v418 = vmul.f32 %v413, %v413
    %419 = vadd.xlane.f32.xlu0 %v418
    %v420 = vpop.xlane.xlu0 %419
    %v421 = vmul.f32 %v420, 0.0625
    %v422 = vmul.f32 %v416, %v416
    %v423 = vsub.f32 %v421, %v422
    %v424 = vadd.f32 %v423, 1e-05
    %v425 = vrsqrt.pop %v424
    %v426 = vmul.f32 %v417, %v425
    %v427 = vpack.c.bf16 %v426, %v426
    %s428 = scalar_lea.vmem [#allocation2], 192
    %v429 = vld [vmem:[%s428] sm:$0xf]
    %v430 = vld [vmem:[%s428 + $0x4] sm:$0xf]
    %v431 = vld [vmem:[%s428 + $0x8] sm:$0xf]
    %v432 = vld [vmem:[%s428 + $0xc] sm:$0xf]
    %v433 = vld [vmem:[%s428 + $0x10] sm:$0xf]
    %v434 = vld [vmem:[%s428 + $0x14] sm:$0xf]
    %v435 = vld [vmem:[%s428 + $0x18] sm:$0xf]
    %v436 = vld [vmem:[%s428 + $0x1c] sm:$0xf]
    %v437 = vld [vmem:[%s428 + $0x20] sm:$0xf]
    %v438 = vld [vmem:[%s428 + $0x24] sm:$0xf]
    %v439 = vld [vmem:[%s428 + $0x28] sm:$0xf]
    %v440 = vld [vmem:[%s428 + $0x2c] sm:$0xf]
    %v441 = vld [vmem:[%s428 + $0x30] sm:$0xf]
    %v442 = vld [vmem:[%s428 + $0x34] sm:$0xf]
    %v443 = vld [vmem:[%s428 + $0x38] sm:$0xf]
    %v444 = vld [vmem:[%s428 + $0x3c] sm:$0xf]
    %v445 = vpack.c.bf16 %v292, %v292
    %s446 = scalar_lea.vmem [#allocation2], 64
    %v447 = vld [vmem:[%s446] sm:$0xf]
    %v448 = vld [vmem:[%s446 + $0x4] sm:$0xf]
    %v449 = vld [vmem:[%s446 + $0x8] sm:$0xf]
    %v450 = vld [vmem:[%s446 + $0xc] sm:$0xf]
    %v451 = vld [vmem:[%s446 + $0x10] sm:$0xf]
    %v452 = vld [vmem:[%s446 + $0x14] sm:$0xf]
    %v453 = vld [vmem:[%s446 + $0x18] sm:$0xf]
    %v454 = vld [vmem:[%s446 + $0x1c] sm:$0xf]
    %v455 = vld [vmem:[%s446 + $0x20] sm:$0xf]
    %v456 = vld [vmem:[%s446 + $0x24] sm:$0xf]
    %v457 = vld [vmem:[%s446 + $0x28] sm:$0xf]
    %v458 = vld [vmem:[%s446 + $0x2c] sm:$0xf]
    %v459 = vld [vmem:[%s446 + $0x30] sm:$0xf]
    %v460 = vld [vmem:[%s446 + $0x34] sm:$0xf]
    %v461 = vld [vmem:[%s446 + $0x38] sm:$0xf]
    %v462 = vld [vmem:[%s446 + $0x3c] sm:$0xf]
    %v479 = vunpack.c.l.b16 %v447
    %v480 = vunpack.c.l.b16 %v448
    %v481 = vunpack.c.l.b16 %v449
    %v482 = vunpack.c.l.b16 %v450
    %v483 = vunpack.c.l.b16 %v451
    %v484 = vunpack.c.l.b16 %v452
    %v485 = vunpack.c.l.b16 %v453
    %v486 = vunpack.c.l.b16 %v454
    %v487 = vunpack.c.l.b16 %v455
    %v488 = vunpack.c.l.b16 %v456
    %v489 = vunpack.c.l.b16 %v457
    %v490 = vunpack.c.l.b16 %v458
    %v491 = vunpack.c.l.b16 %v459
    %v492 = vunpack.c.l.b16 %v460
    %v493 = vunpack.c.l.b16 %v461
    %v494 = vunpack.c.l.b16 %v462
    %v495 = vpack.c.b16 %v480, %v479
    %v496 = vpack.c.b16 %v482, %v481
    %v497 = vpack.c.b16 %v484, %v483
    %v498 = vpack.c.b16 %v486, %v485
    %v499 = vpack.c.b16 %v488, %v487
    %v500 = vpack.c.b16 %v490, %v489
    %v501 = vpack.c.b16 %v492, %v491
    %v502 = vpack.c.b16 %v494, %v493
    %511 = vmatprep.subr.bf16.mxu0 0
    %512 = vmatpush1.bf16.msra.mxu0 %v495
    %513 = vmatprep.subr.bf16.mxu0 0
    %514 = vmatpush1.bf16.msra.mxu0 %v496
    %515 = vmatprep.subr.bf16.mxu0 0
    %516 = vmatpush1.bf16.msra.mxu0 %v497
    %517 = vmatprep.subr.bf16.mxu0 0
    %518 = vmatpush1.bf16.msra.mxu0 %v498
    %519 = vmatprep.subr.bf16.mxu0 0
    %520 = vmatpush1.bf16.msra.mxu0 %v499
    %521 = vmatprep.subr.bf16.mxu0 0
    %522 = vmatpush1.bf16.msra.mxu0 %v500
    %523 = vmatprep.subr.bf16.mxu0 0
    %524 = vmatpush1.bf16.msra.mxu0 %v501
    %525 = vmatprep.subr.bf16.mxu0 0
    %526 = vmatpush1.bf16.msra.mxu0 %v502
    %527 = vmatprep.subr.bf16.mxu0 0
    %528 = vmatpush1.bf16.msra.mxu0 0
    %529 = vmatprep.subr.bf16.mxu0 0
    %530 = vmatpush1.bf16.msra.mxu0 0
    %531 = vmatprep.subr.bf16.mxu0 0
    %532 = vmatpush1.bf16.msra.mxu0 0
    %533 = vmatprep.subr.bf16.mxu0 0
    %534 = vmatpush1.bf16.msra.mxu0 0
    %535 = vmatprep.subr.bf16.mxu0 0
    %536 = vmatpush1.bf16.msra.mxu0 0
    %537 = vmatprep.subr.bf16.mxu0 0
    %538 = vmatpush1.bf16.msra.mxu0 0
    %539 = vmatprep.subr.bf16.mxu0 0
    %540 = vmatpush1.bf16.msra.mxu0 0
    %541 = vmatprep.subr.bf16.mxu0 0
    %542 = vmatpush1.bf16.msra.mxu0 0
    %543 = vmatprep.mubr.bf16.mxu0 0
    %544 = vmatmul.mubr.bf16.gmra.mrb[0].mxu0 %v445
    %v545 = vpop.f32.mrb[0].mxu0
    %v546 = vadd.f32 0.0, %v545
    %v547 = vpop.f32.mrb[0].mxu0
    %v548 = vpop.f32.mrb[0].mxu0
    %v549 = vpop.f32.mrb[0].mxu0
    %550 = vdwg.mxu0
    %v567 = vunpack.c.l.b16 %v429
    %v568 = vunpack.c.l.b16 %v430
    %v569 = vunpack.c.l.b16 %v431
    %v570 = vunpack.c.l.b16 %v432
    %v571 = vunpack.c.l.b16 %v433
    %v572 = vunpack.c.l.b16 %v434
    %v573 = vunpack.c.l.b16 %v435
    %v574 = vunpack.c.l.b16 %v436
    %v575 = vunpack.c.l.b16 %v437
    %v576 = vunpack.c.l.b16 %v438
    %v577 = vunpack.c.l.b16 %v439
    %v578 = vunpack.c.l.b16 %v440
    %v579 = vunpack.c.l.b16 %v441
    %v580 = vunpack.c.l.b16 %v442
    %v581 = vunpack.c.l.b16 %v443
    %v582 = vunpack.c.l.b16 %v444
    %v583 = vpack.c.b16 %v568, %v567
    %v584 = vpack.c.b16 %v570, %v569
    %v585 = vpack.c.b16 %v572, %v571
    %v586 = vpack.c.b16 %v574, %v573
    %v587 = vpack.c.b16 %v576, %v575
    %v588 = vpack.c.b16 %v578, %v577
    %v589 = vpack.c.b16 %v580, %v579
    %v590 = vpack.c.b16 %v582, %v581
    %599 = vmatprep.subr.bf16.mxu0 0
    %600 = vmatpush1.bf16.msra.mxu0 %v583
    %601 = vmatprep.subr.bf16.mxu0 0
    %602 = vmatpush1.bf16.msra.mxu0 %v584
    %603 = vmatprep.subr.bf16.mxu0 0
    %604 = vmatpush1.bf16.msra.mxu0 %v585
    %605 = vmatprep.subr.bf16.mxu0 0
    %606 = vmatpush1.bf16.msra.mxu0 %v586
    %607 = vmatprep.subr.bf16.mxu0 0
    %608 = vmatpush1.bf16.msra.mxu0 %v587
    %609 = vmatprep.subr.bf16.mxu0 0
    %610 = vmatpush1.bf16.msra.mxu0 %v588
    %611 = vmatprep.subr.bf16.mxu0 0
    %612 = vmatpush1.bf16.msra.mxu0 %v589
    %613 = vmatprep.subr.bf16.mxu0 0
    %614 = vmatpush1.bf16.msra.mxu0 %v590
    %615 = vmatprep.subr.bf16.mxu0 0
    %616 = vmatpush1.bf16.msra.mxu0 0
    %617 = vmatprep.subr.bf16.mxu0 0
    %618 = vmatpush1.bf16.msra.mxu0 0
    %619 = vmatprep.subr.bf16.mxu0 0
    %620 = vmatpush1.bf16.msra.mxu0 0
    %621 = vmatprep.subr.bf16.mxu0 0
    %622 = vmatpush1.bf16.msra.mxu0 0
    %623 = vmatprep.subr.bf16.mxu0 0
    %624 = vmatpush1.bf16.msra.mxu0 0
    %625 = vmatprep.subr.bf16.mxu0 0
    %626 = vmatpush1.bf16.msra.mxu0 0
    %627 = vmatprep.subr.bf16.mxu0 0
    %628 = vmatpush1.bf16.msra.mxu0 0
    %629 = vmatprep.subr.bf16.mxu0 0
    %630 = vmatpush1.bf16.msra.mxu0 0
    %631 = vmatprep.mubr.bf16.mxu0 0
    %632 = vmatmul.mubr.bf16.gmra.mrb[0].mxu0 %v427
    %v633 = vpop.f32.mrb[0].mxu0
    %v634 = vadd.f32 %v546, %v633
    %v635 = vpop.f32.mrb[0].mxu0
    %v636 = vpop.f32.mrb[0].mxu0
    %v637 = vpop.f32.mrb[0].mxu0
    %638 = vdwg.mxu0
    %s639 = scalar_lea.vmem %s3, 4
    %v640 = vld [vmem:[%s639] sm:$0x1]
    %v642 = vlaneseq
    %v643 = vshrl.u32 %v642, 7
    %v644 = vsub.s32 0, %v643
    %v645 = vrot.slane %v640, %v644
    %v647 = vadd.f32 %v634, %v645
    %v648 = vpack.c.bf16 %v647, %v647
    %s649 = scalar_lea.vmem [#allocation2], 256
    %v650 = vld [vmem:[%s649] sm:$0xf]
    %v651 = vld [vmem:[%s649 + $0x4] sm:$0xf]
    %v652 = vld [vmem:[%s649 + $0x8] sm:$0xf]
    %v653 = vld [vmem:[%s649 + $0xc] sm:$0xf]
    %v654 = vld [vmem:[%s649 + $0x10] sm:$0xf]
    %v655 = vld [vmem:[%s649 + $0x14] sm:$0xf]
    %v656 = vld [vmem:[%s649 + $0x18] sm:$0xf]
    %v657 = vld [vmem:[%s649 + $0x1c] sm:$0xf]
    %v658 = vld [vmem:[%s649 + $0x20] sm:$0xf]
    %v659 = vld [vmem:[%s649 + $0x24] sm:$0xf]
    %v660 = vld [vmem:[%s649 + $0x28] sm:$0xf]
    %v661 = vld [vmem:[%s649 + $0x2c] sm:$0xf]
    %v662 = vld [vmem:[%s649 + $0x30] sm:$0xf]
    %v663 = vld [vmem:[%s649 + $0x34] sm:$0xf]
    %v664 = vld [vmem:[%s649 + $0x38] sm:$0xf]
    %v665 = vld [vmem:[%s649 + $0x3c] sm:$0xf]
    %s666 = scalar_lea.vmem %s3, 5
    %v667 = vld [vmem:[%s666] sm:$0x1]
    %v669 = vlaneseq
    %v670 = vshrl.u32 %v669, 7
    %v671 = vsub.s32 0, %v670
    %v672 = vrot.slane %v667, %v671
    %v690 = vunpack.c.l.b16 %v650
    %v691 = vunpack.c.l.b16 %v651
    %v692 = vunpack.c.l.b16 %v652
    %v693 = vunpack.c.l.b16 %v653
    %v694 = vunpack.c.l.b16 %v654
    %v695 = vunpack.c.l.b16 %v655
    %v696 = vunpack.c.l.b16 %v656
    %v697 = vunpack.c.l.b16 %v657
    %v698 = vunpack.c.l.b16 %v658
    %v699 = vunpack.c.l.b16 %v659
    %v700 = vunpack.c.l.b16 %v660
    %v701 = vunpack.c.l.b16 %v661
    %v702 = vunpack.c.l.b16 %v662
    %v703 = vunpack.c.l.b16 %v663
    %v704 = vunpack.c.l.b16 %v664
    %v705 = vunpack.c.l.b16 %v665
    %v706 = vpack.c.b16 %v691, %v690
    %v707 = vpack.c.b16 %v693, %v692
    %v708 = vpack.c.b16 %v695, %v694
    %v709 = vpack.c.b16 %v697, %v696
    %v710 = vpack.c.b16 %v699, %v698
    %v711 = vpack.c.b16 %v701, %v700
    %v712 = vpack.c.b16 %v703, %v702
    %v713 = vpack.c.b16 %v705, %v704
    %722 = vmatprep.subr.bf16.mxu0 0
    %723 = vmatpush1.bf16.msra.mxu0 %v706
    %724 = vmatprep.subr.bf16.mxu0 0
    %725 = vmatpush1.bf16.msra.mxu0 %v707
    %726 = vmatprep.subr.bf16.mxu0 0
    %727 = vmatpush1.bf16.msra.mxu0 %v708
    %728 = vmatprep.subr.bf16.mxu0 0
    %729 = vmatpush1.bf16.msra.mxu0 %v709
    %730 = vmatprep.subr.bf16.mxu0 0
    %731 = vmatpush1.bf16.msra.mxu0 %v710
    %732 = vmatprep.subr.bf16.mxu0 0
    %733 = vmatpush1.bf16.msra.mxu0 %v711
    %734 = vmatprep.subr.bf16.mxu0 0
    %735 = vmatpush1.bf16.msra.mxu0 %v712
    %736 = vmatprep.subr.bf16.mxu0 0
    %737 = vmatpush1.bf16.msra.mxu0 %v713
    %738 = vmatprep.subr.bf16.mxu0 0
    %739 = vmatpush1.bf16.msra.mxu0 0
    %740 = vmatprep.subr.bf16.mxu0 0
    %741 = vmatpush1.bf16.msra.mxu0 0
    %742 = vmatprep.subr.bf16.mxu0 0
    %743 = vmatpush1.bf16.msra.mxu0 0
    %744 = vmatprep.subr.bf16.mxu0 0
    %745 = vmatpush1.bf16.msra.mxu0 0
    %746 = vmatprep.subr.bf16.mxu0 0
    %747 = vmatpush1.bf16.msra.mxu0 0
    %748 = vmatprep.subr.bf16.mxu0 0
    %749 = vmatpush1.bf16.msra.mxu0 0
    %750 = vmatprep.subr.bf16.mxu0 0
    %751 = vmatpush1.bf16.msra.mxu0 0
    %752 = vmatprep.subr.bf16.mxu0 0
    %753 = vmatpush1.bf16.msra.mxu0 0
    %754 = vmatprep.mubr.bf16.mxu0 0
    %755 = vmatmul.mubr.bf16.gmra.mrb[0].mxu0 %v648
    %v756 = vpop.f32.mrb[0].mxu0
    %v757 = vadd.f32 %v672, %v756
    %v758 = vpop.f32.mrb[0].mxu0
    %v759 = vpop.f32.mrb[0].mxu0
    %v760 = vpop.f32.mrb[0].mxu0
    %761 = vdwg.mxu0
    %v762 = vsub.f32 0.0, %v757
    %v763 = vmul.f32 %v762, 1.442695
    %v764 = vpow.pop %v763
    %v765 = vadd.f32 %v764, 1.0
    %v766 = vrcp.pop %v765
    %v767 = vmul.f32 %v757, %v766
    %768 = vadd.xlane.f32.xlu0 %v767
    %v769 = vpop.xlane.xlu0 %768
    %v770 = vmul.f32 %v769, 0.0078125
    %v771 = vsub.f32 %v767, %v770
    %v772 = vmul.f32 %v771, %v771
    %773 = vadd.xlane.f32.xlu0 %v772
    %v774 = vpop.xlane.xlu0 %773
    %v775 = vmul.f32 %v774, 0.0078125
    %v776 = vadd.f32 %v775, 1e-05
    %v777 = vrsqrt.pop %v776
    %v778 = vmul.f32 %v771, %v777
    %v779 = vpack.c.bf16 %v778, %v778
    %s780 = scalar_lea.vmem [#allocation2], 320
    %v781 = vld [vmem:[%s780] sm:$0xf]
    %v782 = vld [vmem:[%s780 + $0x4] sm:$0xf]
    %v783 = vld [vmem:[%s780 + $0x8] sm:$0xf]
    %v784 = vld [vmem:[%s780 + $0xc] sm:$0xf]
    %v785 = vld [vmem:[%s780 + $0x10] sm:$0xf]
    %v786 = vld [vmem:[%s780 + $0x14] sm:$0xf]
    %v787 = vld [vmem:[%s780 + $0x18] sm:$0xf]
    %v788 = vld [vmem:[%s780 + $0x1c] sm:$0xf]
    %v789 = vld [vmem:[%s780 + $0x20] sm:$0xf]
    %v790 = vld [vmem:[%s780 + $0x24] sm:$0xf]
    %v791 = vld [vmem:[%s780 + $0x28] sm:$0xf]
    %v792 = vld [vmem:[%s780 + $0x2c] sm:$0xf]
    %v793 = vld [vmem:[%s780 + $0x30] sm:$0xf]
    %v794 = vld [vmem:[%s780 + $0x34] sm:$0xf]
    %v795 = vld [vmem:[%s780 + $0x38] sm:$0xf]
    %v796 = vld [vmem:[%s780 + $0x3c] sm:$0xf]
    %s797 = scalar_lea.vmem %s3, 6
    %v798 = vld [vmem:[%s797] sm:$0x1]
    %v800 = vlaneseq
    %v801 = vshrl.u32 %v800, 7
    %v802 = vsub.s32 0, %v801
    %v803 = vrot.slane %v798, %v802
    %v821 = vunpack.c.l.b16 %v781
    %v822 = vunpack.c.l.b16 %v782
    %v823 = vunpack.c.l.b16 %v783
    %v824 = vunpack.c.l.b16 %v784
    %v825 = vunpack.c.l.b16 %v785
    %v826 = vunpack.c.l.b16 %v786
    %v827 = vunpack.c.l.b16 %v787
    %v828 = vunpack.c.l.b16 %v788
    %v829 = vunpack.c.l.b16 %v789
    %v830 = vunpack.c.l.b16 %v790
    %v831 = vunpack.c.l.b16 %v791
    %v832 = vunpack.c.l.b16 %v792
    %v833 = vunpack.c.l.b16 %v793
    %v834 = vunpack.c.l.b16 %v794
    %v835 = vunpack.c.l.b16 %v795
    %v836 = vunpack.c.l.b16 %v796
    %v837 = vpack.c.b16 %v822, %v821
    %v838 = vpack.c.b16 %v824, %v823
    %v839 = vpack.c.b16 %v826, %v825
    %v840 = vpack.c.b16 %v828, %v827
    %v841 = vpack.c.b16 %v830, %v829
    %v842 = vpack.c.b16 %v832, %v831
    %v843 = vpack.c.b16 %v834, %v833
    %v844 = vpack.c.b16 %v836, %v835
    %853 = vmatprep.subr.bf16.mxu0 0
    %854 = vmatpush1.bf16.msra.mxu0 %v837
    %855 = vmatprep.subr.bf16.mxu0 0
    %856 = vmatpush1.bf16.msra.mxu0 %v838
    %857 = vmatprep.subr.bf16.mxu0 0
    %858 = vmatpush1.bf16.msra.mxu0 %v839
    %859 = vmatprep.subr.bf16.mxu0 0
    %860 = vmatpush1.bf16.msra.mxu0 %v840
    %861 = vmatprep.subr.bf16.mxu0 0
    %862 = vmatpush1.bf16.msra.mxu0 %v841
    %863 = vmatprep.subr.bf16.mxu0 0
    %864 = vmatpush1.bf16.msra.mxu0 %v842
    %865 = vmatprep.subr.bf16.mxu0 0
    %866 = vmatpush1.bf16.msra.mxu0 %v843
    %867 = vmatprep.subr.bf16.mxu0 0
    %868 = vmatpush1.bf16.msra.mxu0 %v844
    %869 = vmatprep.subr.bf16.mxu0 0
    %870 = vmatpush1.bf16.msra.mxu0 0
    %871 = vmatprep.subr.bf16.mxu0 0
    %872 = vmatpush1.bf16.msra.mxu0 0
    %873 = vmatprep.subr.bf16.mxu0 0
    %874 = vmatpush1.bf16.msra.mxu0 0
    %875 = vmatprep.subr.bf16.mxu0 0
    %876 = vmatpush1.bf16.msra.mxu0 0
    %877 = vmatprep.subr.bf16.mxu0 0
    %878 = vmatpush1.bf16.msra.mxu0 0
    %879 = vmatprep.subr.bf16.mxu0 0
    %880 = vmatpush1.bf16.msra.mxu0 0
    %881 = vmatprep.subr.bf16.mxu0 0
    %882 = vmatpush1.bf16.msra.mxu0 0
    %883 = vmatprep.subr.bf16.mxu0 0
    %884 = vmatpush1.bf16.msra.mxu0 0
    %885 = vmatprep.mubr.bf16.mxu0 0
    %886 = vmatmul.mubr.bf16.gmra.mrb[0].mxu0 %v779
    %v887 = vpop.f32.mrb[0].mxu0
    %v888 = vadd.f32 %v803, %v887
    %v889 = vpop.f32.mrb[0].mxu0
    %v890 = vpop.f32.mrb[0].mxu0
    %v891 = vpop.f32.mrb[0].mxu0
    %892 = vdwg.mxu0
    %v893 = vsub.f32 0.0, %v888
    %v894 = vmul.f32 %v893, 1.442695
    %v895 = vpow.pop %v894
    %v896 = vadd.f32 %v895, 1.0
    %v897 = vrcp.pop %v896
    %v898 = vmul.f32 %v888, %v897
    %899 = vadd.xlane.f32.xlu0 %v898
    %v900 = vpop.xlane.xlu0 %899
    %v901 = vmul.f32 %v900, 0.0078125
    %v902 = vsub.f32 %v898, %v901
    %v903 = vmul.f32 %v902, %v902
    %904 = vadd.xlane.f32.xlu0 %v903
    %v905 = vpop.xlane.xlu0 %904
    %v906 = vmul.f32 %v905, 0.0078125
    %v907 = vadd.f32 %v906, 1e-05
    %v908 = vrsqrt.pop %v907
    %v909 = vmul.f32 %v902, %v908
    %v910 = vpack.c.bf16 %v909, %v909
    %s911 = scalar_lea.vmem [#allocation2], 384
    %v912 = vld [vmem:[%s911] sm:$0xf]
    %v913 = vld [vmem:[%s911 + $0x4] sm:$0xf]
    %v914 = vld [vmem:[%s911 + $0x8] sm:$0xf]
    %v915 = vld [vmem:[%s911 + $0xc] sm:$0xf]
    %v916 = vld [vmem:[%s911 + $0x10] sm:$0xf]
    %v917 = vld [vmem:[%s911 + $0x14] sm:$0xf]
    %v918 = vld [vmem:[%s911 + $0x18] sm:$0xf]
    %v919 = vld [vmem:[%s911 + $0x1c] sm:$0xf]
    %v920 = vld [vmem:[%s911 + $0x20] sm:$0xf]
    %v921 = vld [vmem:[%s911 + $0x24] sm:$0xf]
    %v922 = vld [vmem:[%s911 + $0x28] sm:$0xf]
    %v923 = vld [vmem:[%s911 + $0x2c] sm:$0xf]
    %v924 = vld [vmem:[%s911 + $0x30] sm:$0xf]
    %v925 = vld [vmem:[%s911 + $0x34] sm:$0xf]
    %v926 = vld [vmem:[%s911 + $0x38] sm:$0xf]
    %v927 = vld [vmem:[%s911 + $0x3c] sm:$0xf]
    %s928 = scalar_lea.vmem %s3, 7
    %v929 = vld [vmem:[%s928] sm:$0x1]
    %v931 = vlaneseq
    %v932 = vshrl.u32 %v931, 7
    %v933 = vsub.s32 0, %v932
    %v934 = vrot.slane %v929, %v933
    %v952 = vunpack.c.l.b16 %v912
    %v953 = vunpack.c.l.b16 %v913
    %v954 = vunpack.c.l.b16 %v914
    %v955 = vunpack.c.l.b16 %v915
    %v956 = vunpack.c.l.b16 %v916
    %v957 = vunpack.c.l.b16 %v917
    %v958 = vunpack.c.l.b16 %v918
    %v959 = vunpack.c.l.b16 %v919
    %v960 = vunpack.c.l.b16 %v920
    %v961 = vunpack.c.l.b16 %v921
    %v962 = vunpack.c.l.b16 %v922
    %v963 = vunpack.c.l.b16 %v923
    %v964 = vunpack.c.l.b16 %v924
    %v965 = vunpack.c.l.b16 %v925
    %v966 = vunpack.c.l.b16 %v926
    %v967 = vunpack.c.l.b16 %v927
    %v968 = vpack.c.b16 %v953, %v952
    %v969 = vpack.c.b16 %v955, %v954
    %v970 = vpack.c.b16 %v957, %v956
    %v971 = vpack.c.b16 %v959, %v958
    %v972 = vpack.c.b16 %v961, %v960
    %v973 = vpack.c.b16 %v963, %v962
    %v974 = vpack.c.b16 %v965, %v964
    %v975 = vpack.c.b16 %v967, %v966
    %984 = vmatprep.subr.bf16.mxu0 0
    %985 = vmatpush1.bf16.msra.mxu0 %v968
    %986 = vmatprep.subr.bf16.mxu0 0
    %987 = vmatpush1.bf16.msra.mxu0 %v969
    %988 = vmatprep.subr.bf16.mxu0 0
    %989 = vmatpush1.bf16.msra.mxu0 %v970
    %990 = vmatprep.subr.bf16.mxu0 0
    %991 = vmatpush1.bf16.msra.mxu0 %v971
    %992 = vmatprep.subr.bf16.mxu0 0
    %993 = vmatpush1.bf16.msra.mxu0 %v972
    %994 = vmatprep.subr.bf16.mxu0 0
    %995 = vmatpush1.bf16.msra.mxu0 %v973
    %996 = vmatprep.subr.bf16.mxu0 0
    %997 = vmatpush1.bf16.msra.mxu0 %v974
    %998 = vmatprep.subr.bf16.mxu0 0
    %999 = vmatpush1.bf16.msra.mxu0 %v975
    %1000 = vmatprep.subr.bf16.mxu0 0
    %1001 = vmatpush1.bf16.msra.mxu0 0
    %1002 = vmatprep.subr.bf16.mxu0 0
    %1003 = vmatpush1.bf16.msra.mxu0 0
    %1004 = vmatprep.subr.bf16.mxu0 0
    %1005 = vmatpush1.bf16.msra.mxu0 0
    %1006 = vmatprep.subr.bf16.mxu0 0
    %1007 = vmatpush1.bf16.msra.mxu0 0
    %1008 = vmatprep.subr.bf16.mxu0 0
    %1009 = vmatpush1.bf16.msra.mxu0 0
    %1010 = vmatprep.subr.bf16.mxu0 0
    %1011 = vmatpush1.bf16.msra.mxu0 0
    %1012 = vmatprep.subr.bf16.mxu0 0
    %1013 = vmatpush1.bf16.msra.mxu0 0
    %1014 = vmatprep.subr.bf16.mxu0 0
    %1015 = vmatpush1.bf16.msra.mxu0 0
    %1016 = vmatprep.mubr.bf16.mxu0 0
    %1017 = vmatmul.mubr.bf16.gmra.mrb[0].mxu0 %v910
    %v1018 = vpop.f32.mrb[0].mxu0
    %v1019 = vadd.f32 %v934, %v1018
    %v1020 = vpop.f32.mrb[0].mxu0
    %v1021 = vpop.f32.mrb[0].mxu0
    %v1022 = vpop.f32.mrb[0].mxu0
    %1023 = vdwg.mxu0
    %1024 = vst [vmem:[#allocation5] sm:$0xff] %v1019
    // Predicated region
    $region22: #{tpu_custom_call.1} parent=1 // pred_check
      _
    $region23: #{tpu_custom_call.1} parent=1 // pred_check_branch
      %1026 = sbr.rel (0) target = $region25
    $region24: #{tpu_custom_call.1} parent=1 // pred_region
      %s1028 = ssub.s32 128, 128
      %1029 = vsyncadd [#allocation4], %s1028
      %s1031 = sshll.u32 [#allocation5], 4
      %s1032 = int_to_ptr.vmem [resolvable:$true] %s1031
      %1034 = dma.vmem_to_hbm [thread:$0]  %s1032, 128, %s4, [#allocation4]
    $region25: #{tpu_custom_call.1} parent=1 // pred_fallthru
      _
    // Predicated region
    $region26: #{tpu_custom_call.1} parent=1 // pred_check
      _
    $region27: #{tpu_custom_call.1} parent=1 // pred_check_branch
      %1036 = sbr.rel (0) target = $region29
    $region28: #{tpu_custom_call.1} parent=1 // pred_region
      %1037 = dma.done [#allocation4], 128
    $region29: #{tpu_custom_call.1} parent=1 // pred_fallthru
      _
    %1038 = vsyncpa [#allocation3], 1
    %1039 = vsyncpa [#allocation4], 1

</llo_original>
